<compile_context>
chip_gen: v7x
topology: tpu7x:2x2x1
jax: 0.10.0
libtpu: 0.0.40
codegen_flags: <defaults>
</compile_context>

<pallas_src>
import functools

import jax
import jax.numpy as jnp
from jax import lax
from jax.experimental import pallas as pl
from jax.experimental.pallas import tpu as pltpu

EPS = 1e-5


def _round_up(x, m):
    return ((x + m - 1) // m) * m


# ---------------------------------------------------------------------------
# Kernel
# ---------------------------------------------------------------------------
def _instance_norm_kernel(x_ref, g_ref, b_ref, o_ref, *, fuse_fn):
    # x_ref: (block_rows, H*W)   one row == one (n, c) instance
    # g_ref/b_ref: (block_rows, 1) f32 per-row affine params
    x = x_ref[...].astype(jnp.float32)
    g = g_ref[...]
    b = b_ref[...]

    inv_hw = jnp.float32(1.0 / x.shape[-1])
    mean = jnp.sum(x, axis=-1, keepdims=True) * inv_hw
    # Two-pass (centered) variance: numerically safer than E[x^2] - mean^2.
    var = jnp.sum(jnp.square(x - mean), axis=-1, keepdims=True) * inv_hw

    a = lax.rsqrt(var + EPS) * g          # per-row scale
    shift = b - mean * a                  # per-row shift
    y = x * a + shift                     # single FMA pass over the tile
    if fuse_fn is not None:
        y = fuse_fn(y)                    # elementwise fn -> idle EUP slot
    o_ref[...] = y.astype(o_ref.dtype)


# ---------------------------------------------------------------------------
# Tiling / VMEM planning
# ---------------------------------------------------------------------------
@functools.lru_cache(maxsize=None)
def _hw_info():
    """(target_bytes_per_step, vmem_limit_cap) for the current chip."""
    vmem_cap = 128 << 20
    try:
        info = pltpu.get_tpu_info()
        vmem_cap = int(getattr(info, "vmem_capacity_bytes", vmem_cap))
    except Exception:
        pass
    if vmem_cap <= (64 << 20):
        # v7x-class: 64 MiB VMEM, ~3.2 TB/s HBM -> bigger steps, tight budget.
        target_bytes = 8 << 20
        cap = vmem_cap - (8 << 20)
    else:
        # v5e/v6e-class: 128 MiB VMEM.
        target_bytes = 4 << 20
        cap = min(vmem_cap - (16 << 20), 100 << 20)
    return target_bytes, cap


def _choose_block_rows(rows, hw, itemsize, target_bytes):
    """Row tile: ~target_bytes of f32-equivalent data per step, sublane-aligned,
    >=4 grid steps when possible (>=2 steps per TensorCore on v7x)."""
    sublane = {4: 8, 2: 16, 1: 32}.get(itemsize, 8)
    work_itemsize = 4  # kernel upcasts the tile to f32
    if rows < 4 * sublane:
        return rows
    br = max(sublane, target_bytes // max(1, hw * work_itemsize))
    br = min(br, max(sublane, rows // 4))
    br = max(sublane, (br // sublane) * sublane)
    return min(br, rows)


@functools.lru_cache(maxsize=None)
def _plan(rows, hw, itemsize, block_rows_override):
    target_bytes, vmem_cap_limit = _hw_info()
    if block_rows_override is not None:
        block_rows = min(int(block_rows_override), rows)
    else:
        block_rows = _choose_block_rows(rows, hw, itemsize, target_bytes)
    grid_len = -(-rows // block_rows)
    rows_pad = grid_len * block_rows

    tile_native = block_rows * hw * itemsize
    tile_f32 = block_rows * hw * 4
    gb_bytes = 2 * 2 * _round_up(block_rows, 8) * 128 * 4  # lane-padded, 2-buffered
    # 2x-in + 2x-out native tiles, ~2 f32 intermediate tiles, params, slack.
    vmem_need = 4 * tile_native + 2 * tile_f32 + gb_bytes + (4 << 20)
    vmem_limit = int(max(min(vmem_need, vmem_cap_limit), 1 << 20))
    return block_rows, grid_len, rows_pad, vmem_limit


def _expand_affine(gamma, beta, N, rows_pad):
    """Per-channel (C,) params -> per-(n,c)-row (rows_pad, 1) f32 arrays."""
    C = gamma.shape[0]
    rows = N * C
    g = jnp.tile(gamma.astype(jnp.float32), (N,)).reshape(rows, 1)
    b = jnp.tile(beta.astype(jnp.float32), (N,)).reshape(rows, 1)
    if rows_pad != rows:
        g = jnp.pad(g, ((0, rows_pad - rows), (0, 0)), constant_values=1.0)
        b = jnp.pad(b, ((0, rows_pad - rows), (0, 0)))
    return g, b


# ---------------------------------------------------------------------------
# Public entry point
# ---------------------------------------------------------------------------
def instance_norm2d_pallas(x, gamma, beta, *, fuse_fn=None, block_rows=None,
                           g_rows=None, b_rows=None):
    """InstanceNorm2d(affine=True, eps=1e-5, no running stats) [+ fused elementwise fn].

    x: NCHW. gamma/beta: (C,). Returns fn(IN(x)) if fuse_fn is given, else IN(x).
    fuse_fn must be strictly elementwise (padded remainder rows are dropped).
    """
    N, C, H, W = x.shape
    rows, hw = N * C, H * W
    itemsize = jnp.dtype(x.dtype).itemsize

    block_rows, grid_len, rows_pad, vmem_limit = _plan(rows, hw, itemsize, block_rows)

    x2 = x.reshape(rows, hw)
    if g_rows is None or b_rows is None:
        g_rows, b_rows = _expand_affine(gamma, beta, N, rows_pad)

    kernel = functools.partial(_instance_norm_kernel, fuse_fn=fuse_fn)

    out2 = pl.pallas_call(
        kernel,
        out_shape=jax.ShapeDtypeStruct((rows, hw), x.dtype),
        grid_spec=pltpu.PrefetchScalarGridSpec(
            num_scalar_prefetch=0,
            grid=(grid_len,),
            in_specs=[
                pl.BlockSpec((block_rows, hw), lambda i: (i, 0)),
                pl.BlockSpec((block_rows, 1), lambda i: (i, 0)),
                pl.BlockSpec((block_rows, 1), lambda i: (i, 0)),
            ],
            out_specs=pl.BlockSpec((block_rows, hw), lambda i: (i, 0)),
        ),
        compiler_params=pltpu.CompilerParams(
            dimension_semantics=("parallel",),
            vmem_limit_bytes=vmem_limit,
        ),
    )(x2, g_rows, b_rows)
    return out2.reshape(N, C, H, W)


class PreNormPallas:
    """PreNorm(dim, fn): x -> fn(InstanceNorm2d(dim, affine=True)(x)).

    Matches PyTorch's affine init (weight=1, bias=0) unless gamma/beta are
    given. Set fuse_fn=True only when `fn` is elementwise (it is then applied
    inside the Pallas kernel in f32, halving HBM traffic); otherwise `fn` runs
    as a normal JAX function on the normalized output.
    """

    def __init__(self, dim, fn, *, fuse_fn=False, gamma=None, beta=None):
        self.dim = dim
        self.fn = fn
        self.fuse = fuse_fn
        self.gamma = (jnp.ones((dim,), jnp.float32) if gamma is None
                      else jnp.asarray(gamma, jnp.float32))
        self.beta = (jnp.zeros((dim,), jnp.float32) if beta is None
                     else jnp.asarray(beta, jnp.float32))
        self._affine_cache = {}  # (N, rows_pad) -> (g_rows, b_rows)

    def __call__(self, x):
        N, C, H, W = x.shape
        assert C == self.dim, f"channel mismatch: {C} vs {self.dim}"
        rows, hw = N * C, H * W
        itemsize = jnp.dtype(x.dtype).itemsize
        _, _, rows_pad, _ = _plan(rows, hw, itemsize, None)
        key = (N, rows_pad)
        if key not in self._affine_cache:
            self._affine_cache[key] = _expand_affine(self.gamma, self.beta, N, rows_pad)
        g_rows, b_rows = self._affine_cache[key]

        if self.fuse:
            return instance_norm2d_pallas(x, self.gamma, self.beta,
                                          fuse_fn=self.fn,
                                          g_rows=g_rows, b_rows=b_rows)
        y = instance_norm2d_pallas(x, self.gamma, self.beta,
                                   g_rows=g_rows, b_rows=b_rows)
        return self.fn(y)


# ---------------------------------------------------------------------------
# Reference & tests
# ---------------------------------------------------------------------------
def _reference_prenorm(x, gamma, beta, fn):
    xf = x.astype(jnp.float32)
    mean = jnp.mean(xf, axis=(2, 3), keepdims=True)
    var = jnp.var(xf, axis=(2, 3), keepdims=True)  # biased
    y = (xf - mean) / jnp.sqrt(var + EPS)
    y = y * gamma[None, :, None, None] + beta[None, :, None, None]
    return fn(y)


if __name__ == "__main__":
    key = jax.random.PRNGKey(0)
    kx, kg, kb, kx2, kx3, kx4 = jax.random.split(key, 6)
    fn = jax.nn.gelu  # elementwise -> can be fused into the kernel

    # --- Test 1: spec shape, PyTorch-default affine (w=1, b=0), fused fn ---
    N, C, H, W = 2, 4, 16, 16
    x = jax.random.normal(kx, (N, C, H, W), dtype=jnp.float32)
    module = PreNormPallas(C, fn, fuse_fn=True)
    out = jax.block_until_ready(module(x))
    ref = _reference_prenorm(x, module.gamma, module.beta, fn)
    assert out.shape == (N, C, H, W)
    assert jnp.allclose(out, ref, atol=2e-5, rtol=2e-5), "test1 mismatch vs reference"

    # --- Test 2: multi-step grid, non-trivial affine, unfused fn ---
    N2, C2, H2, W2 = 4, 8, 32, 32
    gamma2 = 1.0 + 0.1 * jax.random.normal(kg, (C2,), dtype=jnp.float32)
    beta2 = 0.1 * jax.random.normal(kb, (C2,), dtype=jnp.float32)
    x2 = jax.random.normal(kx2, (N2, C2, H2, W2), dtype=jnp.float32)
    module2 = PreNormPallas(C2, fn, fuse_fn=False, gamma=gamma2, beta=beta2)
    out2 = jax.block_until_ready(module2(x2))
    ref2 = _reference_prenorm(x2, gamma2, beta2, fn)
    assert jnp.allclose(out2, ref2, atol=2e-5, rtol=2e-5), "test2 mismatch vs reference"

    # --- Test 3: row count not a multiple of the tile (remainder masking) ---
    N3, C3 = 3, 4  # rows = 12, forced block_rows = 8 -> partial last block
    gamma3 = 1.0 + 0.1 * jax.random.normal(kg, (C3,), dtype=jnp.float32)
    beta3 = 0.1 * jax.random.normal(kb, (C3,), dtype=jnp.float32)
    x3 = jax.random.normal(kx3, (N3, C3, 16, 16), dtype=jnp.float32)
    out3 = instance_norm2d_pallas(x3, gamma3, beta3, fuse_fn=fn, block_rows=8)
    out3 = jax.block_until_ready(out3)
    ref3 = _reference_prenorm(x3, gamma3, beta3, fn)
    assert jnp.allclose(out3, ref3, atol=2e-5, rtol=2e-5), "test3 mismatch vs reference"

    # --- Test 4: bf16 input (f32-upcast budgeting path) ---
    N4, C4, H4, W4 = 2, 8, 16, 16
    gamma4 = 1.0 + 0.1 * jax.random.normal(kg, (C4,), dtype=jnp.float32)
    beta4 = 0.1 * jax.random.normal(kb, (C4,), dtype=jnp.float32)
    x4 = jax.random.normal(kx4, (N4, C4, H4, W4), dtype=jnp.float32).astype(jnp.bfloat16)
    out4 = jax.block_until_ready(
        instance_norm2d_pallas(x4, gamma4, beta4, fuse_fn=fn))
    ref4 = _reference_prenorm(x4, gamma4, beta4, fn).astype(jnp.bfloat16)
    assert jnp.allclose(out4.astype(jnp.float32), ref4.astype(jnp.float32),
                        atol=3e-2, rtol=3e-2), "test4 mismatch vs reference"

    print("KERNEL_OK")
</pallas_src>

<mosaic_0001>
module attributes {stable_mosaic.version = 11 : i64} {
  func.func @_instance_norm_kernel(%arg0: i32, %arg1: memref<8x256xf32, #tpu.memory_space<vmem>>, %arg2: memref<8x1xf32, #tpu.memory_space<vmem>>, %arg3: memref<8x1xf32, #tpu.memory_space<vmem>>, %arg4: memref<8x256xf32, #tpu.memory_space<vmem>>) attributes {dimension_semantics = [#tpu.dimension_semantics<parallel>], iteration_bounds = array<i64: 1>, scalar_prefetch = 0 : i64, scratch_operands = 0 : i64, tpu.core_type = #tpu.core_type<tc>, window_params = [{transform_indices = @transform_0, window_bounds = array<i64: 8, 256>}, {transform_indices = @transform_1, window_bounds = array<i64: 8, 1>}, {transform_indices = @transform_2, window_bounds = array<i64: 8, 1>}, {transform_indices = @transform_3, window_bounds = array<i64: 8, 256>}]} {
    %c0 = arith.constant 0 : index
    %c0_0 = arith.constant 0 : index
    %0 = vector.load %arg1[%c0, %c0_0] : memref<8x256xf32, #tpu.memory_space<vmem>>, vector<8x256xf32>
    %c0_1 = arith.constant 0 : index
    %c0_2 = arith.constant 0 : index
    %1 = vector.load %arg2[%c0_1, %c0_2] : memref<8x1xf32, #tpu.memory_space<vmem>>, vector<8x1xf32>
    %c0_3 = arith.constant 0 : index
    %c0_4 = arith.constant 0 : index
    %2 = vector.load %arg3[%c0_3, %c0_4] : memref<8x1xf32, #tpu.memory_space<vmem>>, vector<8x1xf32>
    %cst = arith.constant dense<0.000000e+00> : vector<8xf32>
    %3 = vector.multi_reduction <add>, %0, %cst [1] : vector<8x256xf32> to vector<8xf32>
    %4 = vector.shape_cast %3 : vector<8xf32> to vector<8x1xf32>
    %cst_5 = arith.constant 3.906250e-03 : f32
    %5 = vector.broadcast %cst_5 : f32 to vector<8x1xf32>
    %6 = arith.mulf %4, %5 : vector<8x1xf32>
    %7 = vector.broadcast %6 : vector<8x1xf32> to vector<8x256xf32>
    %8 = arith.subf %0, %7 : vector<8x256xf32>
    %9 = arith.mulf %8, %8 : vector<8x256xf32>
    %cst_6 = arith.constant dense<0.000000e+00> : vector<8xf32>
    %10 = vector.multi_reduction <add>, %9, %cst_6 [1] : vector<8x256xf32> to vector<8xf32>
    %11 = vector.shape_cast %10 : vector<8xf32> to vector<8x1xf32>
    %cst_7 = arith.constant 3.906250e-03 : f32
    %12 = vector.broadcast %cst_7 : f32 to vector<8x1xf32>
    %13 = arith.mulf %11, %12 : vector<8x1xf32>
    %cst_8 = arith.constant 9.99999974E-6 : f32
    %14 = vector.broadcast %cst_8 : f32 to vector<8x1xf32>
    %15 = arith.addf %13, %14 : vector<8x1xf32>
    %16 = math.rsqrt %15 : vector<8x1xf32>
    %17 = arith.mulf %16, %1 : vector<8x1xf32>
    %18 = arith.mulf %6, %17 : vector<8x1xf32>
    %19 = arith.subf %2, %18 : vector<8x1xf32>
    %20 = vector.broadcast %17 : vector<8x1xf32> to vector<8x256xf32>
    %21 = arith.mulf %0, %20 : vector<8x256xf32>
    %22 = vector.broadcast %19 : vector<8x1xf32> to vector<8x256xf32>
    %23 = arith.addf %21, %22 : vector<8x256xf32>
    %24 = arith.mulf %23, %23 : vector<8x256xf32>
    %25 = arith.mulf %23, %24 : vector<8x256xf32>
    %cst_9 = arith.constant 4.471500e-02 : f32
    %26 = vector.broadcast %cst_9 : f32 to vector<8x256xf32>
    %27 = arith.mulf %26, %25 : vector<8x256xf32>
    %28 = arith.addf %23, %27 : vector<8x256xf32>
    %cst_10 = arith.constant 0.797884583 : f32
    %29 = vector.broadcast %cst_10 : f32 to vector<8x256xf32>
    %30 = arith.mulf %29, %28 : vector<8x256xf32>
    %31 = math.tanh %30 : vector<8x256xf32>
    %cst_11 = arith.constant 1.000000e+00 : f32
    %32 = vector.broadcast %cst_11 : f32 to vector<8x256xf32>
    %33 = arith.addf %32, %31 : vector<8x256xf32>
    %cst_12 = arith.constant 5.000000e-01 : f32
    %34 = vector.broadcast %cst_12 : f32 to vector<8x256xf32>
    %35 = arith.mulf %34, %33 : vector<8x256xf32>
    %36 = arith.mulf %23, %35 : vector<8x256xf32>
    %c0_13 = arith.constant 0 : index
    %c0_14 = arith.constant 0 : index
    %37 = vector.load %arg4[%c0_13, %c0_14] : memref<8x256xf32, #tpu.memory_space<vmem>>, vector<8x256xf32>
    tpu.vector_store %arg4[%c0_13, %c0_14], %36 {strides = array<i32>} : memref<8x256xf32, #tpu.memory_space<vmem>>, vector<8x256xf32>,
    return
  }
  func.func @transform_0(%arg0: i32) -> (i32, i32) {
    %c0_i32 = arith.constant 0 : i32
    %c0_i32_0 = arith.constant 0 : i32
    return %arg0, %c0_i32 : i32, i32
  }
  func.func @transform_1(%arg0: i32) -> (i32, i32) {
    %c0_i32 = arith.constant 0 : i32
    %c0_i32_0 = arith.constant 0 : i32
    return %arg0, %c0_i32 : i32, i32
  }
  func.func @transform_2(%arg0: i32) -> (i32, i32) {
    %c0_i32 = arith.constant 0 : i32
    %c0_i32_0 = arith.constant 0 : i32
    return %arg0, %c0_i32 : i32, i32
  }
  func.func @transform_3(%arg0: i32) -> (i32, i32) {
    %c0_i32 = arith.constant 0 : i32
    %c0_i32_0 = arith.constant 0 : i32
    return %arg0, %c0_i32 : i32, i32
  }
}

</mosaic_0001>

<llo_original>
// kernel: tpu_custom_call.1
$region0: #{tpu_custom_call.1}
  #allocation0 [shape = 'u32[]', space=smem, size = 0x4, offset = 0x4, fixed_abs, tag = 'smem constant byte address 0x4 - core index']
  #allocation1 [shape = 'u32[144,128]{1,0:T(1,128)}', space=vmem, size = 0x12000, scoped, tag = 'internal scratch']
  %s0 = inlined_call_operand.vmem [shape: f32[8,256], index: 0, kind: input, shape index: {}]
  %s1 = inlined_call_operand.vmem [shape: f32[8,1], index: 1, kind: input, shape index: {}]
  %s2 = inlined_call_operand.vmem [shape: f32[8,1], index: 2, kind: input, shape index: {}]
  %s3 = inlined_call_operand.hbm [shape: f32[8,256], index: 3, kind: output, shape index: {}]
  %s4 = sld [smem:[#allocation0]]
  $region22: #{tpu_custom_call.1} parent=0
    _
  %s6 = ssub.s32 1, %s4
  %s7 = scalar_select 0, %s6, %s4
  $region1: #{tpu_custom_call.1} parent=0
    #allocation2 [shape = 'u8[8192]{0}', space=vmem, size = 0x2000, scoped, tag = 'output window, operand 0, single buffered']
    #allocation3 [shape = 's32[1]{0}', space=sflag, size = 0x4, scoped, tag = 'scoped memory for tpu_custom_call.1']
    %8 = vsyncpa [#allocation3], 0
    // Predicated region
    $region2: #{tpu_custom_call.1} parent=1 // pred_check
      _
    $region3: #{tpu_custom_call.1} parent=1 // pred_check_branch
      %10 = sbr.rel (0) target = $region5
    $region4: #{tpu_custom_call.1} parent=1 // pred_region
      _
    $region5: #{tpu_custom_call.1} parent=1 // pred_fallthru
      _
    // Predicated region
    $region6: #{tpu_custom_call.1} parent=1 // pred_check
      _
    $region7: #{tpu_custom_call.1} parent=1 // pred_check_branch
      %12 = sbr.rel (0) target = $region9
    $region8: #{tpu_custom_call.1} parent=1 // pred_region
      _
    $region9: #{tpu_custom_call.1} parent=1 // pred_fallthru
      _
    // Predicated region
    $region10: #{tpu_custom_call.1} parent=1 // pred_check
      _
    $region11: #{tpu_custom_call.1} parent=1 // pred_check_branch
      %14 = sbr.rel (0) target = $region13
    $region12: #{tpu_custom_call.1} parent=1 // pred_region
      _
    $region13: #{tpu_custom_call.1} parent=1 // pred_fallthru
      _
    %v15 = vld [vmem:[%s0] sm:$0xff]
    %v16 = vld [vmem:[%s0 + $0x8] sm:$0xff]
    %v17 = vld [vmem:[%s1] sm:$0xff]
    %v18 = vld [vmem:[%s2] sm:$0xff]
    %v19 = vadd.f32 %v15, %v16
    %20 = vadd.xlane.f32.xlu0 %v19
    %v21 = vpop.xlane.xlu0 %20
    %v22 = vmul.f32 %v21, 0.00390625
    %v23 = vsub.f32 %v15, %v22
    %v24 = vsub.f32 %v16, %v22
    %v25 = vmul.f32 %v23, %v23
    %v26 = vmul.f32 %v24, %v24
    %v27 = vadd.f32 %v25, %v26
    %28 = vadd.xlane.f32.xlu0 %v27
    %v29 = vpop.xlane.xlu0 %28
    %v30 = vmul.f32 %v29, 0.00390625
    %v31 = vadd.f32 %v30, 1e-05
    %v32 = vrsqrt.pop %v31
    %v33 = vmul.f32 %v32, %v17
    %v34 = vmul.f32 %v22, %v33
    %v35 = vsub.f32 %v18, %v34
    %37 = vset.pattern.permute.xlu0 0
    %38 = vperm.xlu0 %37, %v33
    %v39 = vpop.permute.xlu0 %38
    %v41 = vmul.f32 %v15, %v39
    %v42 = vmul.f32 %v16, %v39
    %44 = vset.pattern.permute.xlu0 0
    %45 = vperm.xlu0 %44, %v35
    %v46 = vpop.permute.xlu0 %45
    %v48 = vadd.f32 %v41, %v46
    %v49 = vadd.f32 %v42, %v46
    %v50 = vmul.f32 %v48, %v48
    %v51 = vmul.f32 %v49, %v49
    %v52 = vmul.f32 %v48, %v50
    %v53 = vmul.f32 %v49, %v51
    %v54 = vmul.f32 %v52, 0.044715
    %v55 = vmul.f32 %v53, 0.044715
    %v56 = vadd.f32 %v48, %v54
    %v57 = vadd.f32 %v49, %v55
    %v58 = vmul.f32 %v56, 0.7978846
    %v59 = vmul.f32 %v57, 0.7978846
    %v60 = vtanh.pop %v58
    %v61 = vtanh.pop %v59
    %v62 = vadd.f32 %v60, 1.0
    %v63 = vadd.f32 %v61, 1.0
    %v64 = vmul.f32 %v62, 0.5
    %v65 = vmul.f32 %v63, 0.5
    %v66 = vmul.f32 %v48, %v64
    %v67 = vmul.f32 %v49, %v65
    %68 = vst [vmem:[#allocation2] sm:$0xff] %v66
    %69 = vst [vmem:[#allocation2 + $0x8] sm:$0xff] %v67
    // Predicated region
    $region14: #{tpu_custom_call.1} parent=1 // pred_check
      _
    $region15: #{tpu_custom_call.1} parent=1 // pred_check_branch
      %71 = sbr.rel (0) target = $region17
    $region16: #{tpu_custom_call.1} parent=1 // pred_region
      %s73 = ssub.s32 256, 256
      %74 = vsyncadd [#allocation3], %s73
      %s76 = sshll.u32 [#allocation2], 4
      %s77 = int_to_ptr.vmem [resolvable:$true] %s76
      %79 = dma.vmem_to_hbm [thread:$0]  %s77, 256, %s3, [#allocation3]
    $region17: #{tpu_custom_call.1} parent=1 // pred_fallthru
      _
    // Predicated region
    $region18: #{tpu_custom_call.1} parent=1 // pred_check
      _
    $region19: #{tpu_custom_call.1} parent=1 // pred_check_branch
      %81 = sbr.rel (0) target = $region21
    $region20: #{tpu_custom_call.1} parent=1 // pred_region
      %82 = dma.done [#allocation3], 256
    $region21: #{tpu_custom_call.1} parent=1 // pred_fallthru
      _
    %83 = vsyncpa [#allocation3], 1

</llo_original>
